<compile_context>
chip_gen: v5e
topology: v5e:2x2
jax: 0.10.0
libtpu: 0.0.40
codegen_flags: <defaults>
</compile_context>

<pallas_src>
import functools

import numpy as np

import jax
import jax.numpy as jnp
from jax import lax
from jax.experimental import pallas as pl
from jax.experimental.pallas import tpu as pltpu


def _ceil_to(n, m):
    return ((n + m - 1) // m) * m


# ---------------------------------------------------------------------------
# Host-side constant operators (baked into the jitted graph as literals).
# ---------------------------------------------------------------------------
def _dft_constants(H, W):
    """fftshift(fft2(., 'ortho')) and Re(ifft2(ifftshift(.), 'ortho')) as real
    (HW, HW) matrices acting on flattened row-major (H, W) images."""
    HW = H * W
    eye = np.eye(HW, dtype=np.float64).reshape(HW, H, W)
    F = np.fft.fftshift(np.fft.fft2(eye, norm="ortho"),
                        axes=(-2, -1)).reshape(HW, HW)
    B = np.fft.ifft2(np.fft.ifftshift(eye, axes=(-2, -1)),
                     norm="ortho").reshape(HW, HW)
    # x_re @ F.real / x_re @ F.imag give Re/Im of the shifted spectrum;
    # gr @ B.real + gi @ (-B.imag) gives Re(ifft2(ifftshift(gr + i*gi))).
    return (F.real.astype(np.float32), F.imag.astype(np.float32),
            B.real.astype(np.float32), (-B.imag).astype(np.float32))


def _pool_matrix(h_in, w_in, h_out, w_out):
    """adaptive_avg_pool2d (exactly divisible sizes) as an (HWin, HWout) matmul."""
    kh, kw = h_in // h_out, w_in // w_out
    ph = np.zeros((h_in, h_out), np.float32)
    ph[np.arange(h_in), np.arange(h_in) // kh] = 1.0 / kh
    pw = np.zeros((w_in, w_out), np.float32)
    pw[np.arange(w_in), np.arange(w_in) // kw] = 1.0 / kw
    return np.kron(ph, pw)


def _upsample_1d(n_in, n_out):
    u = np.zeros((n_in, n_out), np.float32)
    scale = n_in / n_out
    for o in range(n_out):
        src = max((o + 0.5) * scale - 0.5, 0.0)
        i0 = min(int(np.floor(src)), n_in - 1)
        i1 = min(i0 + 1, n_in - 1)
        lam = src - i0
        u[i0, o] += 1.0 - lam
        u[i1, o] += lam
    return u


def _upsample_matrix(h_in, w_in, h_out, w_out):
    """F.interpolate(mode='bilinear', align_corners=False) as a matmul."""
    return np.kron(_upsample_1d(h_in, h_out), _upsample_1d(w_in, w_out))


# ---------------------------------------------------------------------------
# In-kernel helpers.
# ---------------------------------------------------------------------------
def _cyclic_shift(x, offset, axis, roll_is_jnp):
    """y[.., p, ..] = x[.., (p + offset) % n, ..] along `axis` (static offset)."""
    n = x.shape[axis]
    off = offset % n
    if off == 0:
        return x
    k = (-off) % n if roll_is_jnp else off
    return pltpu.roll(x, k, axis=axis)


def _conv3x3(x, w, b, H, W, act, roll_is_jnp):
    """3x3 'same' conv as one im2col matmul.

    x: (Cin_p, H*W) channels on sublanes, flattened spatial on lanes.
    w: (Cout_p, 9*Cin_p) packed weight (tap-major, channel-minor).
    b: (Cout_p, 1).
    """
    cin, hw = x.shape
    use_roll = (hw % 128 == 0)              # XLU lane-rotate path (16x16 planes)
    pos = lax.broadcasted_iota(jnp.int32, (1, hw), 1)
    col = pos % W
    row = pos // W

    taps = []
    for dy in (-1, 0, 1):
        for dx in (-1, 0, 1):
            s = dy * W + dx
            if use_roll:
                sh = _cyclic_shift(x, s, 1, roll_is_jnp)
            else:                            # zero-fill shift (tiny planes)
                if s > 0:
                    sh = jnp.concatenate(
                        [x[:, s:], jnp.zeros((cin, s), x.dtype)], axis=1)
                elif s < 0:
                    sh = jnp.concatenate(
                        [jnp.zeros((cin, -s), x.dtype), x[:, :hw + s]], axis=1)
                else:
                    sh = x
            conds = []
            if dx == -1:
                conds.append(col >= 1)
            if dx == 1:
                conds.append(col <= W - 2)
            if use_roll:                     # cyclic roll wraps rows: mask dy too
                if dy == -1:
                    conds.append(row >= 1)
                if dy == 1:
                    conds.append(row <= H - 2)
            if conds:
                m = conds[0]
                for c in conds[1:]:
                    m = m & c
                sh = sh * m.astype(x.dtype)
            taps.append(sh)

    patches = jnp.concatenate(taps, axis=0)                  # (9*Cin_p, H*W)
    acc = jnp.dot(w, patches, preferred_element_type=jnp.float32) + b
    if act == "leaky":                        # LeakyReLU(0.2)
        acc = jnp.where(acc >= 0.0, acc, 0.2 * acc)
    elif act == "relu_half":                  # relu(x) / 2
        acc = jnp.maximum(acc, 0.0) * 0.5
    return acc


# ---------------------------------------------------------------------------
# The single fused MFFE kernel.
# ---------------------------------------------------------------------------
def _make_mffe_kernel(C, H, W, roll_is_jnp):
    h1, w1 = H // 8, W // 8
    h2, w2 = H // 4, W // 4
    h3, w3 = H // 2, W // 2
    n1, n2, n3 = h1 * w1, h2 * w2, h3 * w3

    def kernel(xsp_ref, xfr_ref,
               mre_ref, mim_ref, pall_ref, u12_ref, u23_ref, uall_ref,
               br_ref, bi_ref,
               wc1_ref, bc1_ref, wc2_ref, bc2_ref,
               wf1_ref, bf1_ref, wf2_ref, bf2_ref, wf3_ref, bf3_ref,
               w11h_ref, w11f_ref, b11_ref,
               o_ref):
        f32 = jnp.float32

        # ---- frequency branch: fftshift(fft2(x)) as two constant matmuls ----
        xfr = xfr_ref[...]                    # (C2p, HW); rows >= C are zero
        re = jnp.dot(xfr, mre_ref[...], preferred_element_type=f32)
        im = jnp.dot(xfr, mim_ref[...], preferred_element_type=f32)
        # Stack [Re ; Im] on sublanes: rows >= C of `re` and rows < C of the
        # shifted `im` are exactly zero, so one sublane roll + add suffices.
        fftreal = re + _cyclic_shift(im, -C, 0, roll_is_jnp)   # (C2p, HW)

        # ---- the three adaptive avg-pools fused into ONE matmul ----
        gaps = jnp.dot(fftreal, pall_ref[...], preferred_element_type=f32)
        gap1 = gaps[:, :n1]
        gap2 = gaps[:, n1:n1 + n2]
        gap3 = gaps[:, n1 + n2:]

        fo1 = _conv3x3(gap1, wf1_ref[...], bf1_ref[...], h1, w1,
                       "relu_half", roll_is_jnp)
        x2 = jnp.dot(fo1, u12_ref[...], preferred_element_type=f32) + gap2
        fo2 = _conv3x3(x2, wf2_ref[...], bf2_ref[...], h2, w2,
                       "relu_half", roll_is_jnp)
        x3 = jnp.dot(fo2, u23_ref[...], preferred_element_type=f32) + gap3
        fo3 = _conv3x3(x3, wf3_ref[...], bf3_ref[...], h3, w3,
                       "relu_half", roll_is_jnp)

        # ---- 3-scale bilinear blend fused into ONE matmul ----
        fo_all = jnp.concatenate([fo1, fo2, fo3], axis=1)      # (C2p, 84)
        fout = jnp.dot(fo_all, uall_ref[...],
                       preferred_element_type=f32) * (1.0 / 3.0)  # (C2p, HW)

        # ---- Re(ifft2(ifftshift(.))) as two constant matmuls.  The channel
        #      ifftshift is pre-folded into the conv11 weight columns. ----
        fim = _cyclic_shift(fout, C, 0, roll_is_jnp)  # rows 0..C-1 = Im half
        q = (jnp.dot(fout, br_ref[...], preferred_element_type=f32)
             + jnp.dot(fim, bi_ref[...], preferred_element_type=f32))
        # rows >= C of q are garbage; killed by zero columns of w11f.

        # ---- spatial branch: conv1 -> leaky -> conv2 -> + identity ----
        xsp = xsp_ref[...]                    # (Cp, HW)
        t = _conv3x3(xsp, wc1_ref[...], bc1_ref[...], H, W,
                     "leaky", roll_is_jnp)
        hsp = _conv3x3(t, wc2_ref[...], bc2_ref[...], H, W,
                       "none", roll_is_jnp) + xsp

        # ---- concat + 1x1 conv as two K-split matmuls (no concat buffer) ----
        o_ref[...] = (jnp.dot(w11h_ref[...], hsp, preferred_element_type=f32)
                      + jnp.dot(w11f_ref[...], q, preferred_element_type=f32)
                      + b11_ref[...])

    return kernel


# ---------------------------------------------------------------------------
# Forward wrapper (one pallas_call for the whole module).
# ---------------------------------------------------------------------------
def mffe_forward(x_nchw, params, *, roll_is_jnp=True):
    N, C, H, W = x_nchw.shape
    if H % 8 or W % 8:
        raise ValueError("H and W must be divisible by 8")
    HW = H * W
    Cp = _ceil_to(C, 8)
    C2p = _ceil_to(2 * C, 8)

    x_flat = x_nchw.astype(jnp.float32).reshape(N, C, HW)
    # Spatial-branch input, zero-padded to Cp sublanes.
    x_sp = jnp.pad(x_flat, ((0, 0), (0, Cp - C), (0, 0)))
    # Frequency-branch input: torch's fftshift over the channel dim (applied to
    # the complex fft) commutes with the per-channel spatial DFT, so it is just
    # a channel roll of x.  The batch-dim fftshift/ifftshift pair cancels.
    x_fr = jnp.pad(jnp.roll(x_flat, C // 2, axis=1),
                   ((0, 0), (0, C2p - C), (0, 0)))

    # Host-side constant operators (become jit constants).
    mre, mim, br, bi = _dft_constants(H, W)
    h1, w1 = H // 8, W // 8
    h2, w2 = H // 4, W // 4
    h3, w3 = H // 2, W // 2
    p_all = np.concatenate([_pool_matrix(H, W, h1, w1),
                            _pool_matrix(H, W, h2, w2),
                            _pool_matrix(H, W, h3, w3)], axis=1)
    u12 = _upsample_matrix(h1, w1, h2, w2)
    u23 = _upsample_matrix(h2, w2, h3, w3)
    u_all = np.concatenate([_upsample_matrix(h1, w1, H, W),
                            _upsample_matrix(h2, w2, H, W),
                            _upsample_matrix(h3, w3, H, W)], axis=0)
    consts = tuple(jnp.asarray(a, dtype=jnp.float32)
                   for a in (mre, mim, p_all, u12, u23, u_all, br, bi))

    weights = (*params["conv1"], *params["conv2"],
               *params["fconv1"], *params["fconv2"], *params["fconv3"],
               *params["conv11"])

    in_specs = [pl.BlockSpec((None, Cp, HW), lambda n: (n, 0, 0)),
                pl.BlockSpec((None, C2p, HW), lambda n: (n, 0, 0))]
    in_specs += [pl.BlockSpec(a.shape, lambda n: (0, 0))
                 for a in consts + weights]

    out = pl.pallas_call(
        _make_mffe_kernel(C, H, W, roll_is_jnp),
        out_shape=jax.ShapeDtypeStruct((N, Cp, HW), jnp.float32),
        grid=(N,),
        in_specs=in_specs,
        out_specs=pl.BlockSpec((None, Cp, HW), lambda n: (n, 0, 0)),
        compiler_params=pltpu.CompilerParams(
            dimension_semantics=("parallel",)),
    )(x_sp, x_fr, *consts, *weights)

    # Lane/sublane-dense (8, HW) store in the kernel; slice the pad rows here.
    return out[:, :C, :].reshape(N, C, H, W)


# ---------------------------------------------------------------------------
# Parameter init (PyTorch Conv2d-style uniform bounds), pre-packed into the
# kernel layout: (Cout_p, 9*Cin_p) weights and (Cout_p, 1) biases.
# ---------------------------------------------------------------------------
def _init_conv3x3(key, cin, cout, cin_p, cout_p):
    k1, k2 = jax.random.split(key)
    bound = 1.0 / (cin * 9) ** 0.5
    w = jax.random.uniform(k1, (cout, 3, 3, cin), jnp.float32, -bound, bound)
    b = jax.random.uniform(k2, (cout,), jnp.float32, -bound, bound)
    wp = jnp.zeros((cout_p, 3, 3, cin_p), jnp.float32)
    wp = wp.at[:cout, :, :, :cin].set(w)
    bp = jnp.zeros((cout_p, 1), jnp.float32).at[:cout, 0].set(b)
    return wp.reshape(cout_p, 9 * cin_p), bp


def init_params(key, channels):
    C, C2 = channels, 2 * channels
    Cp, C2p = _ceil_to(C, 8), _ceil_to(C2, 8)
    keys = jax.random.split(key, 6)

    # 1x1 fuse conv: split K into spatial / frequency halves; output rows and
    # padded K columns are zero; the frequency-half columns are pre-permuted to
    # absorb the channel-dim ifftshift of the reference.
    k1, k2 = jax.random.split(keys[5])
    bound = 1.0 / C2 ** 0.5
    w11 = jax.random.uniform(k1, (C, C2), jnp.float32, -bound, bound)
    b11 = jax.random.uniform(k2, (C,), jnp.float32, -bound, bound)
    w11h = jnp.zeros((Cp, Cp), jnp.float32).at[:C, :C].set(w11[:, :C])
    perm = jnp.asarray([(c - C // 2) % C for c in range(C)])
    w11f = jnp.zeros((Cp, C2p), jnp.float32).at[:C, :C].set(w11[:, C:][:, perm])
    b11p = jnp.zeros((Cp, 1), jnp.float32).at[:C, 0].set(b11)

    return {
        "conv1":  _init_conv3x3(keys[0], C, C, Cp, Cp),
        "conv2":  _init_conv3x3(keys[1], C, C, Cp, Cp),
        "fconv1": _init_conv3x3(keys[2], C2, C2, C2p, C2p),
        "fconv2": _init_conv3x3(keys[3], C2, C2, C2p, C2p),
        "fconv3": _init_conv3x3(keys[4], C2, C2, C2p, C2p),
        "conv11": (w11h, w11f, b11p),
    }


# ---------------------------------------------------------------------------
# One-off probe: pin pltpu.roll's rotation direction so the static im2col
# shifts are correct regardless of convention.  Runs once, outside jit.
# ---------------------------------------------------------------------------
def _detect_roll_convention():
    def k(x_ref, o_ref):
        o_ref[...] = pltpu.roll(x_ref[...], 1, axis=1)

    x = lax.broadcasted_iota(jnp.float32, (8, 128), 1)
    y = pl.pallas_call(
        k, out_shape=jax.ShapeDtypeStruct((8, 128), jnp.float32))(x)
    # jnp.roll convention: y[p] = x[p - 1]  =>  y[0, 1] == 0.
    return bool(jax.device_get(y)[0, 1] == 0.0)


# ---------------------------------------------------------------------------
if __name__ == "__main__":
    key = jax.random.PRNGKey(0)
    k_x, k_p = jax.random.split(key)

    N, C, H, W = 2, 4, 16, 16
    x = jax.random.normal(k_x, (N, C, H, W), jnp.float32)
    params = init_params(k_p, C)

    roll_is_jnp = _detect_roll_convention()
    fwd = jax.jit(functools.partial(mffe_forward, roll_is_jnp=roll_is_jnp))
    out = jax.block_until_ready(fwd(x, params))

    assert out.shape == (N, C, H, W), out.shape
    if bool(jnp.isnan(out).any()):
        print("nan detected!")
    print("KERNEL_OK")
</pallas_src>

<mosaic_0001>
module attributes {stable_mosaic.version = 11 : i64} {
  func.func @k(%arg0: memref<8x128xf32, #tpu.memory_space<vmem>>, %arg1: memref<8x128xf32, #tpu.memory_space<vmem>>) attributes {dimension_semantics = [], scalar_prefetch = 0 : i64, scratch_operands = 0 : i64, tpu.core_type = #tpu.core_type<tc>} {
    %c0 = arith.constant 0 : index
    %c0_0 = arith.constant 0 : index
    %0 = vector.load %arg0[%c0, %c0_0] : memref<8x128xf32, #tpu.memory_space<vmem>>, vector<8x128xf32>
    %c1_i32 = arith.constant 1 : i32
    %1 = tpu.dynamic_rotate %0 by %c1_i32 dim 1 : vector<8x128xf32>, i32 -> vector<8x128xf32>
    %c0_1 = arith.constant 0 : index
    %c0_2 = arith.constant 0 : index
    %2 = vector.load %arg1[%c0_1, %c0_2] : memref<8x128xf32, #tpu.memory_space<vmem>>, vector<8x128xf32>
    tpu.vector_store %arg1[%c0_1, %c0_2], %1 {strides = array<i32>} : memref<8x128xf32, #tpu.memory_space<vmem>>, vector<8x128xf32>,
    return
  }
}

</mosaic_0001>

<llo_original>
// kernel: tpu_custom_call.1
$region0: #{tpu_custom_call.1}
  #allocation0 [shape = 'u32[]', space=smem, size = 0x4, offset = 0x4, fixed_abs, tag = 'smem constant byte address 0x4 - core index']
  #allocation1 [shape = 'u32[72,128]{1,0:T(1,128)}', space=vmem, size = 0x9000, scoped, tag = 'internal scratch']
  %s0 = inlined_call_operand.hbm [shape: f32[8,128], index: 0, kind: input, shape index: {}]
  %s1 = inlined_call_operand.hbm [shape: f32[8,128], index: 1, kind: output, shape index: {}]
  %s2 = sld [smem:[#allocation0]]
  $region18: #{tpu_custom_call.1} parent=0
    _
  %s4 = ssub.s32 1, %s2
  %s5 = scalar_select 0, %s4, %s2
  $region1: #{tpu_custom_call.1} parent=0
    #allocation2 [shape = 'u8[4096]{0}', space=vmem, size = 0x1000, scoped, tag = 'input window, operand 0, single buffered']
    #allocation3 [shape = 's32[1]{0}', space=sflag, size = 0x4, scoped, tag = 'scoped memory for tpu_custom_call.1']
    #allocation4 [shape = 's32[1]{0}', space=sflag, size = 0x4, scoped, tag = 'scoped memory for tpu_custom_call.1']
    #allocation5 [shape = 'u8[4096]{0}', space=vmem, size = 0x1000, scoped, tag = 'output window, operand 0, single buffered']
    %6 = vsyncpa [#allocation3], 0
    %7 = vsyncpa [#allocation4], 0
    // Predicated region
    $region2: #{tpu_custom_call.1} parent=1 // pred_check
      _
    $region3: #{tpu_custom_call.1} parent=1 // pred_check_branch
      %9 = sbr.rel (0) target = $region5
    $region4: #{tpu_custom_call.1} parent=1 // pred_region
      %11 = vsyncadd [#allocation3], 0
      %s13 = sshll.u32 %s0, 4
      %s14 = int_to_ptr.hbm [resolvable:$true] %s13
      %s15 = sshll.u32 [#allocation2], 4
      %s16 = int_to_ptr.vmem [resolvable:$true] %s15
      %18 = dma.hbm_to_vmem [thread:$0]  %s14, 128, %s16, [#allocation3]
    $region5: #{tpu_custom_call.1} parent=1 // pred_fallthru
      _
    // Predicated region
    $region6: #{tpu_custom_call.1} parent=1 // pred_check
      _
    $region7: #{tpu_custom_call.1} parent=1 // pred_check_branch
      %20 = sbr.rel (0) target = $region9
    $region8: #{tpu_custom_call.1} parent=1 // pred_region
      %22 = dma.done [#allocation3], 128
    $region9: #{tpu_custom_call.1} parent=1 // pred_fallthru
      _
    %v23 = vld [vmem:[#allocation2] sm:$0xff]
    %24 = vrot.lane.b32.xlu0 %v23, 1
    %v25 = vpop.permute.xlu0 %24
    %26 = vst [vmem:[#allocation5] sm:$0xff] %v25
    // Predicated region
    $region10: #{tpu_custom_call.1} parent=1 // pred_check
      _
    $region11: #{tpu_custom_call.1} parent=1 // pred_check_branch
      %28 = sbr.rel (0) target = $region13
    $region12: #{tpu_custom_call.1} parent=1 // pred_region
      %30 = vsyncadd [#allocation4], 0
      %s32 = sshll.u32 [#allocation5], 4
      %s33 = int_to_ptr.vmem [resolvable:$true] %s32
      %s34 = sshll.u32 %s1, 4
      %s35 = int_to_ptr.hbm [resolvable:$true] %s34
      %37 = dma.vmem_to_hbm [thread:$0]  %s33, 128, %s35, [#allocation4]
    $region13: #{tpu_custom_call.1} parent=1 // pred_fallthru
      _
    // Predicated region
    $region14: #{tpu_custom_call.1} parent=1 // pred_check
      _
    $region15: #{tpu_custom_call.1} parent=1 // pred_check_branch
      %39 = sbr.rel (0) target = $region17
    $region16: #{tpu_custom_call.1} parent=1 // pred_region
      %41 = dma.done [#allocation4], 128
    $region17: #{tpu_custom_call.1} parent=1 // pred_fallthru
      _
    %42 = vsyncpa [#allocation3], 1
    %43 = vsyncpa [#allocation4], 1

</llo_original>
